<compile_context>
chip_gen: v6e
topology: v6e:2x2x1
jax: 0.10.0
libtpu: 0.0.40
codegen_flags: <defaults>
</compile_context>

<pallas_src>
import functools

import jax
import jax.numpy as jnp
from jax.experimental import pallas as pl
from jax.experimental.pallas import tpu as pltpu

_IN = 6
_HID = 21
_OUT = 3


def _round_up(n, m):
    return ((n + m - 1) // m) * m


def _pick_block(batch, block_b):
    """Lane-aligned batch block; large batches get >=2 grid steps (v7x 2-TC)."""
    n_tiles = -(-max(batch, 1) // 128)          # number of 128-lane tiles
    max_tiles = max(1, block_b // 128)
    if n_tiles >= 2:
        bb_tiles = min(max_tiles, -(-n_tiles // 2))   # at least 2 grid steps
    else:
        bb_tiles = 1
    return bb_tiles * 128


def _mlp_kernel(x_ref, w1_ref, w2_ref, w3_ref, w4_ref, aux_ref, o_ref,
                *, matmul_dtype):
    # x_ref: (6, BB)  -- features on sublanes, batch on lanes (lane-dense).
    # w*_ref: (out, in) weight tiles, resident in VMEM across the whole grid.
    # aux_ref: (21, 8) packed columns [b1, a1, b2, a2, b3, a3, b4(pad), unused].
    x = x_ref[...]
    w1 = w1_ref[...]
    aux = aux_ref[...]
    b1, a1 = aux[:, 0:1], aux[:, 1:2]
    b2, a2 = aux[:, 2:3], aux[:, 3:4]
    b3, a3 = aux[:, 4:5], aux[:, 5:6]
    b4 = aux[0:_OUT, 6:7]

    def prelu(h, a):
        # a is (F, 1): broadcasts over the lane (batch) axis.
        return jnp.where(h >= 0, h, a * h)

    def mxu(w, h):
        # Explicit operand dtype pins the MXU pass count; accumulate in f32.
        return jnp.dot(w.astype(matmul_dtype), h.astype(matmul_dtype),
                       preferred_element_type=jnp.float32)

    # ---- L1 on the VPU: K=6 would waste >95% of an MXU pass; an unrolled
    #      broadcast-MAC runs in otherwise-idle VALU slots under the MXU shadow.
    h = b1 + w1[:, 0:1] * x[0:1, :]                       # (21, BB)
    for f in range(1, _IN):                               # static unroll (5 terms)
        h = h + w1[:, f:f + 1] * x[f:f + 1, :]
    h = prelu(h, a1)

    # ---- L2..L4 on the MXU.
    h = prelu(mxu(w2_ref[...], h) + b2, a2)               # (21, BB)
    h = prelu(mxu(w3_ref[...], h) + b3, a3)               # (21, BB)
    h = mxu(w4_ref[...], h) + b4                          # (3, BB)
    o_ref[...] = jnp.exp(h).astype(o_ref.dtype)


def pack_params(params):
    """Torch-layout params -> kernel operands.

    params = (w1, b1, a1, w2, b2, a2, w3, b3, a3, w4, b4) where each w is
    (out, in) like nn.Linear, biases/alphas are (out,).
    Returns (w1, w2, w3, w4, aux) with aux a (21, 8) f32 slab packing all
    biases and PReLU alphas (b4 zero-padded from 3 to 21 rows).
    """
    (w1, b1, a1, w2, b2, a2, w3, b3, a3, w4, b4) = params
    aux = jnp.zeros((_HID, 8), jnp.float32)
    aux = aux.at[:, 0].set(b1).at[:, 1].set(a1)
    aux = aux.at[:, 2].set(b2).at[:, 3].set(a2)
    aux = aux.at[:, 4].set(b3).at[:, 5].set(a3)
    aux = aux.at[0:_OUT, 6].set(b4)
    return (w1.astype(jnp.float32), w2.astype(jnp.float32),
            w3.astype(jnp.float32), w4.astype(jnp.float32), aux)


def model_m_forward_t(x_t, params, *, block_b=131072,
                      matmul_dtype=jnp.float32):
    """Lane-dense entry point.  x_t: (6, B) float32 -> (3, B) float32.

    Callers that already hold (features, batch) data should use this directly
    to avoid the wrapper-side transpose copies.
    """
    _, B = x_t.shape
    w1, w2, w3, w4, aux = pack_params(params)

    bb = _pick_block(B, block_b)
    B_pad = _round_up(max(B, 1), bb)

    x_t = x_t.astype(jnp.float32)
    if B_pad != B:
        x_t = jnp.pad(x_t, ((0, 0), (0, B_pad - B)))      # single fused pad

    kernel = functools.partial(_mlp_kernel, matmul_dtype=matmul_dtype)
    out_t = pl.pallas_call(
        kernel,
        out_shape=jax.ShapeDtypeStruct((_OUT, B_pad), jnp.float32),
        grid=(B_pad // bb,),
        in_specs=[
            pl.BlockSpec((_IN, bb), lambda i: (0, i)),       # x: tiled over batch
            pl.BlockSpec((_HID, _IN), lambda i: (0, 0)),     # W1 resident
            pl.BlockSpec((_HID, _HID), lambda i: (0, 0)),    # W2 resident
            pl.BlockSpec((_HID, _HID), lambda i: (0, 0)),    # W3 resident
            pl.BlockSpec((_OUT, _HID), lambda i: (0, 0)),    # W4 resident
            pl.BlockSpec((_HID, 8), lambda i: (0, 0)),       # packed biases/alphas
        ],
        out_specs=pl.BlockSpec((_OUT, bb), lambda i: (0, i)),
        compiler_params=pltpu.CompilerParams(
            dimension_semantics=("parallel",),   # shards grid steps on v7x 2-TC
            vmem_limit_bytes=32 * 1024 * 1024,   # safe on v5e/v6e/v7x, fits bb<=131072
        ),
    )(x_t, w1, w2, w3, w4, aux)
    return out_t[:, :B]


def model_m_forward(x, params, *, block_b=131072, matmul_dtype=jnp.float32):
    """x: (B, 6) float32 -> (B, 3) float32 (PyTorch Model_M layout)."""
    out_t = model_m_forward_t(x.T, params, block_b=block_b,
                              matmul_dtype=matmul_dtype)
    return out_t.T


def init_params(key):
    """Deterministic init mirroring nn.Linear / nn.PReLU (torch layouts)."""
    dims = [(6, 21), (21, 21), (21, 21), (21, 3)]
    keys = jax.random.split(key, 2 * len(dims))
    params = []
    for i, (fin, fout) in enumerate(dims):
        bound = 1.0 / jnp.sqrt(fin)
        w = jax.random.uniform(keys[2 * i], (fout, fin), jnp.float32, -bound, bound)
        b = jax.random.uniform(keys[2 * i + 1], (fout,), jnp.float32, -bound, bound)
        params.append(w)
        params.append(b)
        if i < 3:  # PReLU after first three linears
            alpha = 0.25 + 0.01 * jnp.arange(fout, dtype=jnp.float32)
            params.append(alpha)
    return tuple(params)


def reference_forward(x, params):
    (w1, b1, a1, w2, b2, a2, w3, b3, a3, w4, b4) = params

    def prelu(h, a):
        return jnp.where(h >= 0, h, a * h)

    h = prelu(x @ w1.T + b1, a1)
    h = prelu(h @ w2.T + b2, a2)
    h = prelu(h @ w3.T + b3, a3)
    return jnp.exp(h @ w4.T + b4)


if __name__ == "__main__":
    key = jax.random.PRNGKey(0)
    pkey, xkey, xkey2 = jax.random.split(key, 3)
    params = init_params(pkey)

    # Small single-block case.
    B = 8
    x = jax.random.normal(xkey, (B, 6), dtype=jnp.float32)
    out = jax.block_until_ready(model_m_forward(x, params))
    ref = reference_forward(x, params)
    assert out.shape == (B, 3), out.shape
    assert jnp.allclose(out, ref, atol=1e-4, rtol=1e-4), (
        f"max abs err {jnp.max(jnp.abs(out - ref))}"
    )

    # Multi-block case (exercises grid > 1, padding, and the lane-dense path).
    B2 = 1000
    x2 = jax.random.normal(xkey2, (B2, 6), dtype=jnp.float32)
    out2 = jax.block_until_ready(model_m_forward(x2, params))
    ref2 = reference_forward(x2, params)
    assert out2.shape == (B2, 3), out2.shape
    assert jnp.allclose(out2, ref2, atol=1e-4, rtol=1e-4), (
        f"max abs err {jnp.max(jnp.abs(out2 - ref2))}"
    )

    print("KERNEL_OK")
</pallas_src>

<mosaic_0001>
module attributes {stable_mosaic.version = 11 : i64} {
  func.func @_mlp_kernel(%arg0: i32, %arg1: memref<6x128xf32, #tpu.memory_space<vmem>>, %arg2: memref<21x6xf32, #tpu.memory_space<vmem>>, %arg3: memref<21x21xf32, #tpu.memory_space<vmem>>, %arg4: memref<21x21xf32, #tpu.memory_space<vmem>>, %arg5: memref<3x21xf32, #tpu.memory_space<vmem>>, %arg6: memref<21x8xf32, #tpu.memory_space<vmem>>, %arg7: memref<3x128xf32, #tpu.memory_space<vmem>>) attributes {dimension_semantics = [#tpu.dimension_semantics<parallel>], iteration_bounds = array<i64: 1>, scalar_prefetch = 0 : i64, scratch_operands = 0 : i64, tpu.core_type = #tpu.core_type<tc>, window_params = [{transform_indices = @transform_0, window_bounds = array<i64: 6, 128>}, {pipeline_mode = #tpu.pipeline_mode<synchronous>, transform_indices = @transform_1, window_bounds = array<i64: 21, 6>}, {pipeline_mode = #tpu.pipeline_mode<synchronous>, transform_indices = @transform_2, window_bounds = array<i64: 21, 21>}, {pipeline_mode = #tpu.pipeline_mode<synchronous>, transform_indices = @transform_3, window_bounds = array<i64: 21, 21>}, {pipeline_mode = #tpu.pipeline_mode<synchronous>, transform_indices = @transform_4, window_bounds = array<i64: 3, 21>}, {pipeline_mode = #tpu.pipeline_mode<synchronous>, transform_indices = @transform_5, window_bounds = array<i64: 21, 8>}, {transform_indices = @transform_6, window_bounds = array<i64: 3, 128>}]} {
    %c0 = arith.constant 0 : index
    %c0_0 = arith.constant 0 : index
    %0 = vector.load %arg1[%c0, %c0_0] : memref<6x128xf32, #tpu.memory_space<vmem>>, vector<6x128xf32>
    %c0_1 = arith.constant 0 : index
    %c0_2 = arith.constant 0 : index
    %1 = vector.load %arg2[%c0_1, %c0_2] : memref<21x6xf32, #tpu.memory_space<vmem>>, vector<21x6xf32>
    %c0_3 = arith.constant 0 : index
    %c0_4 = arith.constant 0 : index
    %2 = vector.load %arg6[%c0_3, %c0_4] : memref<21x8xf32, #tpu.memory_space<vmem>>, vector<21x8xf32>
    %3 = vector.extract_strided_slice %2 {offsets = [0, 0], sizes = [21, 1], strides = [1, 1]} : vector<21x8xf32> to vector<21x1xf32>
    %4 = vector.extract_strided_slice %2 {offsets = [0, 1], sizes = [21, 1], strides = [1, 1]} : vector<21x8xf32> to vector<21x1xf32>
    %5 = vector.extract_strided_slice %2 {offsets = [0, 2], sizes = [21, 1], strides = [1, 1]} : vector<21x8xf32> to vector<21x1xf32>
    %6 = vector.extract_strided_slice %2 {offsets = [0, 3], sizes = [21, 1], strides = [1, 1]} : vector<21x8xf32> to vector<21x1xf32>
    %7 = vector.extract_strided_slice %2 {offsets = [0, 4], sizes = [21, 1], strides = [1, 1]} : vector<21x8xf32> to vector<21x1xf32>
    %8 = vector.extract_strided_slice %2 {offsets = [0, 5], sizes = [21, 1], strides = [1, 1]} : vector<21x8xf32> to vector<21x1xf32>
    %9 = vector.extract_strided_slice %2 {offsets = [0, 6], sizes = [3, 1], strides = [1, 1]} : vector<21x8xf32> to vector<3x1xf32>
    %10 = vector.extract_strided_slice %1 {offsets = [0, 0], sizes = [21, 1], strides = [1, 1]} : vector<21x6xf32> to vector<21x1xf32>
    %11 = vector.extract_strided_slice %0 {offsets = [0, 0], sizes = [1, 128], strides = [1, 1]} : vector<6x128xf32> to vector<1x128xf32>
    %12 = vector.broadcast %10 : vector<21x1xf32> to vector<21x128xf32>
    %13 = vector.broadcast %11 : vector<1x128xf32> to vector<21x128xf32>
    %14 = arith.mulf %12, %13 : vector<21x128xf32>
    %15 = vector.broadcast %3 : vector<21x1xf32> to vector<21x128xf32>
    %16 = arith.addf %15, %14 : vector<21x128xf32>
    %17 = vector.extract_strided_slice %1 {offsets = [0, 1], sizes = [21, 1], strides = [1, 1]} : vector<21x6xf32> to vector<21x1xf32>
    %18 = vector.extract_strided_slice %0 {offsets = [1, 0], sizes = [1, 128], strides = [1, 1]} : vector<6x128xf32> to vector<1x128xf32>
    %19 = vector.broadcast %17 : vector<21x1xf32> to vector<21x128xf32>
    %20 = vector.broadcast %18 : vector<1x128xf32> to vector<21x128xf32>
    %21 = arith.mulf %19, %20 : vector<21x128xf32>
    %22 = arith.addf %16, %21 : vector<21x128xf32>
    %23 = vector.extract_strided_slice %1 {offsets = [0, 2], sizes = [21, 1], strides = [1, 1]} : vector<21x6xf32> to vector<21x1xf32>
    %24 = vector.extract_strided_slice %0 {offsets = [2, 0], sizes = [1, 128], strides = [1, 1]} : vector<6x128xf32> to vector<1x128xf32>
    %25 = vector.broadcast %23 : vector<21x1xf32> to vector<21x128xf32>
    %26 = vector.broadcast %24 : vector<1x128xf32> to vector<21x128xf32>
    %27 = arith.mulf %25, %26 : vector<21x128xf32>
    %28 = arith.addf %22, %27 : vector<21x128xf32>
    %29 = vector.extract_strided_slice %1 {offsets = [0, 3], sizes = [21, 1], strides = [1, 1]} : vector<21x6xf32> to vector<21x1xf32>
    %30 = vector.extract_strided_slice %0 {offsets = [3, 0], sizes = [1, 128], strides = [1, 1]} : vector<6x128xf32> to vector<1x128xf32>
    %31 = vector.broadcast %29 : vector<21x1xf32> to vector<21x128xf32>
    %32 = vector.broadcast %30 : vector<1x128xf32> to vector<21x128xf32>
    %33 = arith.mulf %31, %32 : vector<21x128xf32>
    %34 = arith.addf %28, %33 : vector<21x128xf32>
    %35 = vector.extract_strided_slice %1 {offsets = [0, 4], sizes = [21, 1], strides = [1, 1]} : vector<21x6xf32> to vector<21x1xf32>
    %36 = vector.extract_strided_slice %0 {offsets = [4, 0], sizes = [1, 128], strides = [1, 1]} : vector<6x128xf32> to vector<1x128xf32>
    %37 = vector.broadcast %35 : vector<21x1xf32> to vector<21x128xf32>
    %38 = vector.broadcast %36 : vector<1x128xf32> to vector<21x128xf32>
    %39 = arith.mulf %37, %38 : vector<21x128xf32>
    %40 = arith.addf %34, %39 : vector<21x128xf32>
    %41 = vector.extract_strided_slice %1 {offsets = [0, 5], sizes = [21, 1], strides = [1, 1]} : vector<21x6xf32> to vector<21x1xf32>
    %42 = vector.extract_strided_slice %0 {offsets = [5, 0], sizes = [1, 128], strides = [1, 1]} : vector<6x128xf32> to vector<1x128xf32>
    %43 = vector.broadcast %41 : vector<21x1xf32> to vector<21x128xf32>
    %44 = vector.broadcast %42 : vector<1x128xf32> to vector<21x128xf32>
    %45 = arith.mulf %43, %44 : vector<21x128xf32>
    %46 = arith.addf %40, %45 : vector<21x128xf32>
    %cst = arith.constant 0.000000e+00 : f32
    %47 = vector.broadcast %cst : f32 to vector<21x128xf32>
    %48 = arith.cmpf oge, %46, %47 : vector<21x128xf32>
    %49 = vector.broadcast %4 : vector<21x1xf32> to vector<21x128xf32>
    %50 = arith.mulf %49, %46 : vector<21x128xf32>
    %51 = arith.select %48, %46, %50 : vector<21x128xi1>, vector<21x128xf32>
    %c0_5 = arith.constant 0 : index
    %c0_6 = arith.constant 0 : index
    %52 = vector.load %arg3[%c0_5, %c0_6] : memref<21x21xf32, #tpu.memory_space<vmem>>, vector<21x21xf32>
    %cst_7 = arith.constant dense<0.000000e+00> : vector<21x128xf32>
    %53 = tpu.matmul %52, %51, %cst_7 {dimension_numbers = #tpu.dot_dimension_numbers<[1], [0], [0], [1], [0, 0, 1, 1], [], []>} : vector<21x21xf32>, vector<21x128xf32>, vector<21x128xf32> -> vector<21x128xf32>
    %54 = vector.broadcast %5 : vector<21x1xf32> to vector<21x128xf32>
    %55 = arith.addf %53, %54 : vector<21x128xf32>
    %cst_8 = arith.constant 0.000000e+00 : f32
    %56 = vector.broadcast %cst_8 : f32 to vector<21x128xf32>
    %57 = arith.cmpf oge, %55, %56 : vector<21x128xf32>
    %58 = vector.broadcast %6 : vector<21x1xf32> to vector<21x128xf32>
    %59 = arith.mulf %58, %55 : vector<21x128xf32>
    %60 = arith.select %57, %55, %59 : vector<21x128xi1>, vector<21x128xf32>
    %c0_9 = arith.constant 0 : index
    %c0_10 = arith.constant 0 : index
    %61 = vector.load %arg4[%c0_9, %c0_10] : memref<21x21xf32, #tpu.memory_space<vmem>>, vector<21x21xf32>
    %cst_11 = arith.constant dense<0.000000e+00> : vector<21x128xf32>
    %62 = tpu.matmul %61, %60, %cst_11 {dimension_numbers = #tpu.dot_dimension_numbers<[1], [0], [0], [1], [0, 0, 1, 1], [], []>} : vector<21x21xf32>, vector<21x128xf32>, vector<21x128xf32> -> vector<21x128xf32>
    %63 = vector.broadcast %7 : vector<21x1xf32> to vector<21x128xf32>
    %64 = arith.addf %62, %63 : vector<21x128xf32>
    %cst_12 = arith.constant 0.000000e+00 : f32
    %65 = vector.broadcast %cst_12 : f32 to vector<21x128xf32>
    %66 = arith.cmpf oge, %64, %65 : vector<21x128xf32>
    %67 = vector.broadcast %8 : vector<21x1xf32> to vector<21x128xf32>
    %68 = arith.mulf %67, %64 : vector<21x128xf32>
    %69 = arith.select %66, %64, %68 : vector<21x128xi1>, vector<21x128xf32>
    %c0_13 = arith.constant 0 : index
    %c0_14 = arith.constant 0 : index
    %70 = vector.load %arg5[%c0_13, %c0_14] : memref<3x21xf32, #tpu.memory_space<vmem>>, vector<3x21xf32>
    %cst_15 = arith.constant dense<0.000000e+00> : vector<3x128xf32>
    %71 = tpu.matmul %70, %69, %cst_15 {dimension_numbers = #tpu.dot_dimension_numbers<[1], [0], [0], [1], [0, 0, 1, 1], [], []>} : vector<3x21xf32>, vector<21x128xf32>, vector<3x128xf32> -> vector<3x128xf32>
    %72 = vector.broadcast %9 : vector<3x1xf32> to vector<3x128xf32>
    %73 = arith.addf %71, %72 : vector<3x128xf32>
    %74 = math.exp %73 : vector<3x128xf32>
    %c0_16 = arith.constant 0 : index
    %c0_17 = arith.constant 0 : index
    %75 = vector.load %arg7[%c0_16, %c0_17] : memref<3x128xf32, #tpu.memory_space<vmem>>, vector<3x128xf32>
    tpu.vector_store %arg7[%c0_16, %c0_17], %74 {strides = array<i32>} : memref<3x128xf32, #tpu.memory_space<vmem>>, vector<3x128xf32>,
    return
  }
  func.func @transform_0(%arg0: i32) -> (i32, i32) {
    %c0_i32 = arith.constant 0 : i32
    %c0_i32_0 = arith.constant 0 : i32
    return %c0_i32, %arg0 : i32, i32
  }
  func.func @transform_1(%arg0: i32) -> (i32, i32) {
    %c0_i32 = arith.constant 0 : i32
    %c0_i32_0 = arith.constant 0 : i32
    %c0_i32_1 = arith.constant 0 : i32
    return %c0_i32, %c0_i32_0 : i32, i32
  }
  func.func @transform_2(%arg0: i32) -> (i32, i32) {
    %c0_i32 = arith.constant 0 : i32
    %c0_i32_0 = arith.constant 0 : i32
    %c0_i32_1 = arith.constant 0 : i32
    return %c0_i32, %c0_i32_0 : i32, i32
  }
  func.func @transform_3(%arg0: i32) -> (i32, i32) {
    %c0_i32 = arith.constant 0 : i32
    %c0_i32_0 = arith.constant 0 : i32
    %c0_i32_1 = arith.constant 0 : i32
    return %c0_i32, %c0_i32_0 : i32, i32
  }
  func.func @transform_4(%arg0: i32) -> (i32, i32) {
    %c0_i32 = arith.constant 0 : i32
    %c0_i32_0 = arith.constant 0 : i32
    %c0_i32_1 = arith.constant 0 : i32
    return %c0_i32, %c0_i32_0 : i32, i32
  }
  func.func @transform_5(%arg0: i32) -> (i32, i32) {
    %c0_i32 = arith.constant 0 : i32
    %c0_i32_0 = arith.constant 0 : i32
    %c0_i32_1 = arith.constant 0 : i32
    return %c0_i32, %c0_i32_0 : i32, i32
  }
  func.func @transform_6(%arg0: i32) -> (i32, i32) {
    %c0_i32 = arith.constant 0 : i32
    %c0_i32_0 = arith.constant 0 : i32
    return %c0_i32, %arg0 : i32, i32
  }
}

</mosaic_0001>

<llo_original>
// kernel: tpu_custom_call.1
$region0: #{tpu_custom_call.1}
  #allocation0 [shape = 'u32[]', space=smem, size = 0x4, offset = 0x4, fixed_abs, tag = 'smem constant byte address 0x4 - core index']
  #allocation1 [shape = 'u32[144,128]{1,0:T(1,128)}', space=vmem, size = 0x12000, scoped, tag = 'internal scratch']
  %s0 = inlined_call_operand.vmem [shape: f32[6,128], index: 0, kind: input, shape index: {}]
  %s1 = inlined_call_operand.vmem [shape: f32[21,6], index: 1, kind: input, shape index: {}]
  %s2 = inlined_call_operand.vmem [shape: f32[21,21], index: 2, kind: input, shape index: {}]
  %s3 = inlined_call_operand.vmem [shape: f32[21,21], index: 3, kind: input, shape index: {}]
  %s4 = inlined_call_operand.vmem [shape: f32[3,21], index: 4, kind: input, shape index: {}]
  %s5 = inlined_call_operand.vmem [shape: f32[21,8], index: 5, kind: input, shape index: {}]
  %s6 = inlined_call_operand.hbm [shape: f32[3,128], index: 6, kind: output, shape index: {}]
  %s7 = sld [smem:[#allocation0]]
  $region34: #{tpu_custom_call.1} parent=0
    _
  %s9 = ssub.s32 1, %s7
  %s10 = scalar_select 0, %s9, %s7
  $region1: #{tpu_custom_call.1} parent=0
    #allocation2 [shape = 'u8[2048]{0}', space=vmem, size = 0x800, scoped, tag = 'output window, operand 0, single buffered']
    #allocation3 [shape = 's32[1]{0}', space=sflag, size = 0x4, scoped, tag = 'scoped memory for tpu_custom_call.1']
    %11 = vsyncpa [#allocation3], 0
    // Predicated region
    $region2: #{tpu_custom_call.1} parent=1 // pred_check
      _
    $region3: #{tpu_custom_call.1} parent=1 // pred_check_branch
      %13 = sbr.rel (0) target = $region5
    $region4: #{tpu_custom_call.1} parent=1 // pred_region
      _
    $region5: #{tpu_custom_call.1} parent=1 // pred_fallthru
      _
    // Predicated region
    $region6: #{tpu_custom_call.1} parent=1 // pred_check
      _
    $region7: #{tpu_custom_call.1} parent=1 // pred_check_branch
      %15 = sbr.rel (0) target = $region9
    $region8: #{tpu_custom_call.1} parent=1 // pred_region
      _
    $region9: #{tpu_custom_call.1} parent=1 // pred_fallthru
      _
    // Predicated region
    $region10: #{tpu_custom_call.1} parent=1 // pred_check
      _
    $region11: #{tpu_custom_call.1} parent=1 // pred_check_branch
      %17 = sbr.rel (0) target = $region13
    $region12: #{tpu_custom_call.1} parent=1 // pred_region
      _
    $region13: #{tpu_custom_call.1} parent=1 // pred_fallthru
      _
    // Predicated region
    $region14: #{tpu_custom_call.1} parent=1 // pred_check
      _
    $region15: #{tpu_custom_call.1} parent=1 // pred_check_branch
      %19 = sbr.rel (0) target = $region17
    $region16: #{tpu_custom_call.1} parent=1 // pred_region
      _
    $region17: #{tpu_custom_call.1} parent=1 // pred_fallthru
      _
    // Predicated region
    $region18: #{tpu_custom_call.1} parent=1 // pred_check
      _
    $region19: #{tpu_custom_call.1} parent=1 // pred_check_branch
      %21 = sbr.rel (0) target = $region21
    $region20: #{tpu_custom_call.1} parent=1 // pred_region
      _
    $region21: #{tpu_custom_call.1} parent=1 // pred_fallthru
      _
    // Predicated region
    $region22: #{tpu_custom_call.1} parent=1 // pred_check
      _
    $region23: #{tpu_custom_call.1} parent=1 // pred_check_branch
      %23 = sbr.rel (0) target = $region25
    $region24: #{tpu_custom_call.1} parent=1 // pred_region
      _
    $region25: #{tpu_custom_call.1} parent=1 // pred_fallthru
      _
    %v24 = vld [vmem:[%s0] sm:$0x3f]
    %v25 = vld [vmem:[%s1] sm:$0xff]
    %v26 = vld [vmem:[%s1 + $0x8] sm:$0xff]
    %v27 = vld [vmem:[%s1 + $0x10] sm:$0x1f]
    %v28 = vld [vmem:[%s5] sm:$0xff]
    %v29 = vld [vmem:[%s5 + $0x8] sm:$0xff]
    %v30 = vld [vmem:[%s5 + $0x10] sm:$0x1f]
    %32 = vset.pattern.permute.xlu0 0
    %33 = vperm.xlu0 %32, %v25
    %v34 = vpop.permute.xlu0 %33
    %37 = vset.pattern.permute.xlu0 0
    %38 = vperm.xlu0 %37, %v26
    %v39 = vpop.permute.xlu0 %38
    %42 = vset.pattern.permute.xlu0 0
    %43 = vperm.xlu0 %42, %v27
    %v44 = vpop.permute.xlu0 %43
    %v46 = vlaneseq
    %v47 = vshrl.u32 %v46, 7
    %v48 = vsub.s32 0, %v47
    %v49 = vrot.slane %v24, %v48
    %v50 = vmul.f32 %v34, %v49
    %v51 = vmul.f32 %v39, %v49
    %v52 = vmul.f32 %v44, %v49
    %54 = vset.pattern.permute.xlu0 0
    %55 = vperm.xlu0 %54, %v28
    %v56 = vpop.permute.xlu0 %55
    %59 = vset.pattern.permute.xlu0 0
    %60 = vperm.xlu0 %59, %v29
    %v61 = vpop.permute.xlu0 %60
    %64 = vset.pattern.permute.xlu0 0
    %65 = vperm.xlu0 %64, %v30
    %v66 = vpop.permute.xlu0 %65
    %v68 = vadd.f32 %v56, %v50
    %v69 = vadd.f32 %v61, %v51
    %v70 = vadd.f32 %v66, %v52
    %71 = vset.pattern.permute.xlu0 1
    %72 = vperm.xlu0 %71, %v25
    %v73 = vpop.permute.xlu0 %72
    %75 = vset.pattern.permute.xlu0 1
    %76 = vperm.xlu0 %75, %v26
    %v77 = vpop.permute.xlu0 %76
    %79 = vset.pattern.permute.xlu0 1
    %80 = vperm.xlu0 %79, %v27
    %v81 = vpop.permute.xlu0 %80
    %v83 = vlaneseq
    %v84 = vshrl.u32 %v83, 7
    %v85 = vsub.s32 1, %v84
    %v86 = vrot.slane %v24, %v85
    %v87 = vmul.f32 %v73, %v86
    %v88 = vmul.f32 %v77, %v86
    %v89 = vmul.f32 %v81, %v86
    %v90 = vadd.f32 %v68, %v87
    %v91 = vadd.f32 %v69, %v88
    %v92 = vadd.f32 %v70, %v89
    %93 = vset.pattern.permute.xlu0 2
    %94 = vperm.xlu0 %93, %v25
    %v95 = vpop.permute.xlu0 %94
    %97 = vset.pattern.permute.xlu0 2
    %98 = vperm.xlu0 %97, %v26
    %v99 = vpop.permute.xlu0 %98
    %101 = vset.pattern.permute.xlu0 2
    %102 = vperm.xlu0 %101, %v27
    %v103 = vpop.permute.xlu0 %102
    %v105 = vlaneseq
    %v106 = vshrl.u32 %v105, 7
    %v107 = vsub.s32 2, %v106
    %v108 = vrot.slane %v24, %v107
    %v109 = vmul.f32 %v95, %v108
    %v110 = vmul.f32 %v99, %v108
    %v111 = vmul.f32 %v103, %v108
    %v112 = vadd.f32 %v90, %v109
    %v113 = vadd.f32 %v91, %v110
    %v114 = vadd.f32 %v92, %v111
    %115 = vset.pattern.permute.xlu0 3
    %116 = vperm.xlu0 %115, %v25
    %v117 = vpop.permute.xlu0 %116
    %119 = vset.pattern.permute.xlu0 3
    %120 = vperm.xlu0 %119, %v26
    %v121 = vpop.permute.xlu0 %120
    %123 = vset.pattern.permute.xlu0 3
    %124 = vperm.xlu0 %123, %v27
    %v125 = vpop.permute.xlu0 %124
    %v127 = vlaneseq
    %v128 = vshrl.u32 %v127, 7
    %v129 = vsub.s32 3, %v128
    %v130 = vrot.slane %v24, %v129
    %v131 = vmul.f32 %v117, %v130
    %v132 = vmul.f32 %v121, %v130
    %v133 = vmul.f32 %v125, %v130
    %v134 = vadd.f32 %v112, %v131
    %v135 = vadd.f32 %v113, %v132
    %v136 = vadd.f32 %v114, %v133
    %137 = vset.pattern.permute.xlu0 4
    %138 = vperm.xlu0 %137, %v25
    %v139 = vpop.permute.xlu0 %138
    %141 = vset.pattern.permute.xlu0 4
    %142 = vperm.xlu0 %141, %v26
    %v143 = vpop.permute.xlu0 %142
    %145 = vset.pattern.permute.xlu0 4
    %146 = vperm.xlu0 %145, %v27
    %v147 = vpop.permute.xlu0 %146
    %v149 = vlaneseq
    %v150 = vshrl.u32 %v149, 7
    %v151 = vsub.s32 4, %v150
    %v152 = vrot.slane %v24, %v151
    %v153 = vmul.f32 %v139, %v152
    %v154 = vmul.f32 %v143, %v152
    %v155 = vmul.f32 %v147, %v152
    %v156 = vadd.f32 %v134, %v153
    %v157 = vadd.f32 %v135, %v154
    %v158 = vadd.f32 %v136, %v155
    %159 = vset.pattern.permute.xlu0 5
    %160 = vperm.xlu0 %159, %v25
    %v161 = vpop.permute.xlu0 %160
    %163 = vset.pattern.permute.xlu0 5
    %164 = vperm.xlu0 %163, %v26
    %v165 = vpop.permute.xlu0 %164
    %167 = vset.pattern.permute.xlu0 5
    %168 = vperm.xlu0 %167, %v27
    %v169 = vpop.permute.xlu0 %168
    %v171 = vlaneseq
    %v172 = vshrl.u32 %v171, 7
    %v173 = vsub.s32 5, %v172
    %v174 = vrot.slane %v24, %v173
    %v175 = vmul.f32 %v161, %v174
    %v176 = vmul.f32 %v165, %v174
    %v177 = vmul.f32 %v169, %v174
    %v178 = vadd.f32 %v156, %v175
    %v179 = vadd.f32 %v157, %v176
    %v180 = vadd.f32 %v158, %v177
    %vm181 = vcmp.ge.f32.partialorder %v178, 0.0
    %vm182 = vcmp.ge.f32.partialorder %v179, 0.0
    %vm183 = vcmp.ge.f32.partialorder %v180, 0.0
    %184 = vset.pattern.permute.xlu0 1
    %185 = vperm.xlu0 %184, %v28
    %v186 = vpop.permute.xlu0 %185
    %188 = vset.pattern.permute.xlu0 1
    %189 = vperm.xlu0 %188, %v29
    %v190 = vpop.permute.xlu0 %189
    %192 = vset.pattern.permute.xlu0 1
    %193 = vperm.xlu0 %192, %v30
    %v194 = vpop.permute.xlu0 %193
    %v196 = vmul.f32 %v186, %v178
    %v197 = vmul.f32 %v190, %v179
    %v198 = vmul.f32 %v194, %v180
    %v199 = vsel %vm181, %v178, %v196
    %v200 = vsel %vm182, %v179, %v197
    %v201 = vsel %vm183, %v180, %v198
    %v202 = vld [vmem:[%s2] sm:$0xff]
    %v203 = vld [vmem:[%s2 + $0x8] sm:$0xff]
    %v204 = vld [vmem:[%s2 + $0x10] sm:$0x1f]
    %205 = vset.pattern.permute.xlu0 2
    %206 = vperm.xlu0 %205, %v28
    %v207 = vpop.permute.xlu0 %206
    %209 = vset.pattern.permute.xlu0 2
    %210 = vperm.xlu0 %209, %v29
    %v211 = vpop.permute.xlu0 %210
    %213 = vset.pattern.permute.xlu0 2
    %214 = vperm.xlu0 %213, %v30
    %v215 = vpop.permute.xlu0 %214
    %vm217 = vcmask 171008
    %v219 = vsel %vm217, %v202, 0
    %v222 = vsel %vm217, %v203, 0
    %v225 = vsel %vm217, %v204, 0
    %vm227 = vcmask 1044480
    %v229 = vsel %vm227, %v201, 0
    %231 = vmatprep.subr.mxu0 0.0
    %232 = vmatpush1.msra.mxu0 0.0
    %233 = vmatprep.subr.mxu0 0.0
    %234 = vmatpush1.msra.mxu0 0.0
    %235 = vmatprep.subr.mxu0 0.0
    %236 = vmatpush1.msra.mxu0 0.0
    %237 = vmatprep.subr.mxu0 0.0
    %238 = vmatpush1.msra.mxu0 0.0
    %239 = vmatprep.subr.mxu0 0.0
    %240 = vmatpush1.msra.mxu0 0.0
    %241 = vmatprep.subr.mxu0 0.0
    %242 = vmatpush1.msra.mxu0 0.0
    %243 = vmatprep.subr.mxu0 0.0
    %244 = vmatpush1.msra.mxu0 0.0
    %245 = vmatprep.subr.mxu0 0.0
    %246 = vmatpush1.msra.mxu0 0.0
    %247 = vmatprep.subr.mxu0 0.0
    %248 = vmatpush1.msra.mxu0 0.0
    %249 = vmatprep.subr.mxu0 0.0
    %250 = vmatpush1.msra.mxu0 0.0
    %251 = vmatprep.subr.mxu0 0.0
    %252 = vmatpush1.msra.mxu0 0.0
    %253 = vmatprep.subr.mxu0 0.0
    %254 = vmatpush1.msra.mxu0 0.0
    %255 = vmatprep.subr.mxu0 0.0
    %256 = vmatpush1.msra.mxu0 0.0
    %257 = vmatprep.subr.mxu0 0.0
    %258 = vmatpush1.msra.mxu0 %v229
    %259 = vmatprep.subr.mxu0 0.0
    %260 = vmatpush1.msra.mxu0 %v200
    %261 = vmatprep.subr.mxu0 0.0
    %262 = vmatpush1.msra.mxu0 %v199
    %263 = vmatprep.subr.mxu0 0.0
    %264 = vmatpush2.msra.mxu0 0.0
    %265 = vmatprep.subr.mxu0 0.0
    %266 = vmatpush2.msra.mxu0 0.0
    %267 = vmatprep.subr.mxu0 0.0
    %268 = vmatpush2.msra.mxu0 0.0
    %269 = vmatprep.subr.mxu0 0.0
    %270 = vmatpush2.msra.mxu0 0.0
    %271 = vmatprep.subr.mxu0 0.0
    %272 = vmatpush2.msra.mxu0 0.0
    %273 = vmatprep.subr.mxu0 0.0
    %274 = vmatpush2.msra.mxu0 0.0
    %275 = vmatprep.subr.mxu0 0.0
    %276 = vmatpush2.msra.mxu0 0.0
    %277 = vmatprep.subr.mxu0 0.0
    %278 = vmatpush2.msra.mxu0 0.0
    %279 = vmatprep.subr.mxu0 0.0
    %280 = vmatpush2.msra.mxu0 0.0
    %281 = vmatprep.subr.mxu0 0.0
    %282 = vmatpush2.msra.mxu0 0.0
    %283 = vmatprep.subr.mxu0 0.0
    %284 = vmatpush2.msra.mxu0 0.0
    %285 = vmatprep.subr.mxu0 0.0
    %286 = vmatpush2.msra.mxu0 0.0
    %287 = vmatprep.subr.mxu0 0.0
    %288 = vmatpush2.msra.mxu0 0.0
    %289 = vmatprep.subr.mxu0 0.0
    %290 = vmatpush2.msra.mxu0 0.0
    %291 = vmatprep.subr.mxu0 0.0
    %292 = vmatpush2.msra.mxu0 0.0
    %293 = vmatprep.subr.mxu0 0.0
    %294 = vmatpush2.msra.mxu0 0.0
    %295 = vmatprep.mubr.f32.mxu0 0.0
    %296 = vmatmul.mubr.f32.gmra.mxu0 %v219
    %v297 = vpop.f32.mrf.mxu0
    %v298 = vadd.f32 %v207, %v297
    %v299 = vpop.f32.mrf.mxu0
    %300 = vmatprep.mubr.f32.mxu0 0.0
    %301 = vmatmul.mubr.f32.gmra.mxu0 %v222
    %v302 = vpop.f32.mrf.mxu0
    %v303 = vadd.f32 %v211, %v302
    %v304 = vpop.f32.mrf.mxu0
    %305 = vmatprep.mubr.f32.mxu0 0.0
    %306 = vmatmul.mubr.f32.gmra.mxu0 %v225
    %v307 = vpop.f32.mrf.mxu0
    %v308 = vadd.f32 %v215, %v307
    %v309 = vpop.f32.mrf.mxu0
    %310 = vdwg.mxu0
    %vm311 = vcmp.ge.f32.partialorder %v298, 0.0
    %vm312 = vcmp.ge.f32.partialorder %v303, 0.0
    %vm313 = vcmp.ge.f32.partialorder %v308, 0.0
    %314 = vset.pattern.permute.xlu0 3
    %315 = vperm.xlu0 %314, %v28
    %v316 = vpop.permute.xlu0 %315
    %318 = vset.pattern.permute.xlu0 3
    %319 = vperm.xlu0 %318, %v29
    %v320 = vpop.permute.xlu0 %319
    %322 = vset.pattern.permute.xlu0 3
    %323 = vperm.xlu0 %322, %v30
    %v324 = vpop.permute.xlu0 %323
    %v326 = vmul.f32 %v316, %v298
    %v327 = vmul.f32 %v320, %v303
    %v328 = vmul.f32 %v324, %v308
    %v329 = vsel %vm311, %v298, %v326
    %v330 = vsel %vm312, %v303, %v327
    %v331 = vsel %vm313, %v308, %v328
    %v332 = vld [vmem:[%s3] sm:$0xff]
    %v333 = vld [vmem:[%s3 + $0x8] sm:$0xff]
    %v334 = vld [vmem:[%s3 + $0x10] sm:$0x1f]
    %335 = vset.pattern.permute.xlu0 4
    %336 = vperm.xlu0 %335, %v28
    %v337 = vpop.permute.xlu0 %336
    %339 = vset.pattern.permute.xlu0 4
    %340 = vperm.xlu0 %339, %v29
    %v341 = vpop.permute.xlu0 %340
    %343 = vset.pattern.permute.xlu0 4
    %344 = vperm.xlu0 %343, %v30
    %v345 = vpop.permute.xlu0 %344
    %v348 = vsel %vm217, %v332, 0
    %v351 = vsel %vm217, %v333, 0
    %v354 = vsel %vm217, %v334, 0
    %v357 = vsel %vm227, %v331, 0
    %359 = vmatprep.subr.mxu0 0.0
    %360 = vmatpush1.msra.mxu0 0.0
    %361 = vmatprep.subr.mxu0 0.0
    %362 = vmatpush1.msra.mxu0 0.0
    %363 = vmatprep.subr.mxu0 0.0
    %364 = vmatpush1.msra.mxu0 0.0
    %365 = vmatprep.subr.mxu0 0.0
    %366 = vmatpush1.msra.mxu0 0.0
    %367 = vmatprep.subr.mxu0 0.0
    %368 = vmatpush1.msra.mxu0 0.0
    %369 = vmatprep.subr.mxu0 0.0
    %370 = vmatpush1.msra.mxu0 0.0
    %371 = vmatprep.subr.mxu0 0.0
    %372 = vmatpush1.msra.mxu0 0.0
    %373 = vmatprep.subr.mxu0 0.0
    %374 = vmatpush1.msra.mxu0 0.0
    %375 = vmatprep.subr.mxu0 0.0
    %376 = vmatpush1.msra.mxu0 0.0
    %377 = vmatprep.subr.mxu0 0.0
    %378 = vmatpush1.msra.mxu0 0.0
    %379 = vmatprep.subr.mxu0 0.0
    %380 = vmatpush1.msra.mxu0 0.0
    %381 = vmatprep.subr.mxu0 0.0
    %382 = vmatpush1.msra.mxu0 0.0
    %383 = vmatprep.subr.mxu0 0.0
    %384 = vmatpush1.msra.mxu0 0.0
    %385 = vmatprep.subr.mxu0 0.0
    %386 = vmatpush1.msra.mxu0 %v357
    %387 = vmatprep.subr.mxu0 0.0
    %388 = vmatpush1.msra.mxu0 %v330
    %389 = vmatprep.subr.mxu0 0.0
    %390 = vmatpush1.msra.mxu0 %v329
    %391 = vmatprep.subr.mxu0 0.0
    %392 = vmatpush2.msra.mxu0 0.0
    %393 = vmatprep.subr.mxu0 0.0
    %394 = vmatpush2.msra.mxu0 0.0
    %395 = vmatprep.subr.mxu0 0.0
    %396 = vmatpush2.msra.mxu0 0.0
    %397 = vmatprep.subr.mxu0 0.0
    %398 = vmatpush2.msra.mxu0 0.0
    %399 = vmatprep.subr.mxu0 0.0
    %400 = vmatpush2.msra.mxu0 0.0
    %401 = vmatprep.subr.mxu0 0.0
    %402 = vmatpush2.msra.mxu0 0.0
    %403 = vmatprep.subr.mxu0 0.0
    %404 = vmatpush2.msra.mxu0 0.0
    %405 = vmatprep.subr.mxu0 0.0
    %406 = vmatpush2.msra.mxu0 0.0
    %407 = vmatprep.subr.mxu0 0.0
    %408 = vmatpush2.msra.mxu0 0.0
    %409 = vmatprep.subr.mxu0 0.0
    %410 = vmatpush2.msra.mxu0 0.0
    %411 = vmatprep.subr.mxu0 0.0
    %412 = vmatpush2.msra.mxu0 0.0
    %413 = vmatprep.subr.mxu0 0.0
    %414 = vmatpush2.msra.mxu0 0.0
    %415 = vmatprep.subr.mxu0 0.0
    %416 = vmatpush2.msra.mxu0 0.0
    %417 = vmatprep.subr.mxu0 0.0
    %418 = vmatpush2.msra.mxu0 0.0
    %419 = vmatprep.subr.mxu0 0.0
    %420 = vmatpush2.msra.mxu0 0.0
    %421 = vmatprep.subr.mxu0 0.0
    %422 = vmatpush2.msra.mxu0 0.0
    %423 = vmatprep.mubr.f32.mxu0 0.0
    %424 = vmatmul.mubr.f32.gmra.mxu0 %v348
    %v425 = vpop.f32.mrf.mxu0
    %v426 = vadd.f32 %v337, %v425
    %v427 = vpop.f32.mrf.mxu0
    %428 = vmatprep.mubr.f32.mxu0 0.0
    %429 = vmatmul.mubr.f32.gmra.mxu0 %v351
    %v430 = vpop.f32.mrf.mxu0
    %v431 = vadd.f32 %v341, %v430
    %v432 = vpop.f32.mrf.mxu0
    %433 = vmatprep.mubr.f32.mxu0 0.0
    %434 = vmatmul.mubr.f32.gmra.mxu0 %v354
    %v435 = vpop.f32.mrf.mxu0
    %v436 = vadd.f32 %v345, %v435
    %v437 = vpop.f32.mrf.mxu0
    %438 = vdwg.mxu0
    %vm439 = vcmp.ge.f32.partialorder %v426, 0.0
    %vm440 = vcmp.ge.f32.partialorder %v431, 0.0
    %vm441 = vcmp.ge.f32.partialorder %v436, 0.0
    %442 = vset.pattern.permute.xlu0 5
    %443 = vperm.xlu0 %442, %v28
    %v444 = vpop.permute.xlu0 %443
    %446 = vset.pattern.permute.xlu0 5
    %447 = vperm.xlu0 %446, %v29
    %v448 = vpop.permute.xlu0 %447
    %450 = vset.pattern.permute.xlu0 5
    %451 = vperm.xlu0 %450, %v30
    %v452 = vpop.permute.xlu0 %451
    %v454 = vmul.f32 %v444, %v426
    %v455 = vmul.f32 %v448, %v431
    %v456 = vmul.f32 %v452, %v436
    %v457 = vsel %vm439, %v426, %v454
    %v458 = vsel %vm440, %v431, %v455
    %v459 = vsel %vm441, %v436, %v456
    %v460 = vld [vmem:[%s4] sm:$0x7]
    %461 = vset.pattern.permute.xlu0 6
    %462 = vperm.xlu0 %461, %v28
    %v463 = vpop.permute.xlu0 %462
    %v466 = vsel %vm217, %v460, 0
    %v469 = vsel %vm227, %v459, 0
    %471 = vmatprep.subr.mxu0 0.0
    %472 = vmatpush1.msra.mxu0 0.0
    %473 = vmatprep.subr.mxu0 0.0
    %474 = vmatpush1.msra.mxu0 0.0
    %475 = vmatprep.subr.mxu0 0.0
    %476 = vmatpush1.msra.mxu0 0.0
    %477 = vmatprep.subr.mxu0 0.0
    %478 = vmatpush1.msra.mxu0 0.0
    %479 = vmatprep.subr.mxu0 0.0
    %480 = vmatpush1.msra.mxu0 0.0
    %481 = vmatprep.subr.mxu0 0.0
    %482 = vmatpush1.msra.mxu0 0.0
    %483 = vmatprep.subr.mxu0 0.0
    %484 = vmatpush1.msra.mxu0 0.0
    %485 = vmatprep.subr.mxu0 0.0
    %486 = vmatpush1.msra.mxu0 0.0
    %487 = vmatprep.subr.mxu0 0.0
    %488 = vmatpush1.msra.mxu0 0.0
    %489 = vmatprep.subr.mxu0 0.0
    %490 = vmatpush1.msra.mxu0 0.0
    %491 = vmatprep.subr.mxu0 0.0
    %492 = vmatpush1.msra.mxu0 0.0
    %493 = vmatprep.subr.mxu0 0.0
    %494 = vmatpush1.msra.mxu0 0.0
    %495 = vmatprep.subr.mxu0 0.0
    %496 = vmatpush1.msra.mxu0 0.0
    %497 = vmatprep.subr.mxu0 0.0
    %498 = vmatpush1.msra.mxu0 %v469
    %499 = vmatprep.subr.mxu0 0.0
    %500 = vmatpush1.msra.mxu0 %v458
    %501 = vmatprep.subr.mxu0 0.0
    %502 = vmatpush1.msra.mxu0 %v457
    %503 = vmatprep.subr.mxu0 0.0
    %504 = vmatpush2.msra.mxu0 0.0
    %505 = vmatprep.subr.mxu0 0.0
    %506 = vmatpush2.msra.mxu0 0.0
    %507 = vmatprep.subr.mxu0 0.0
    %508 = vmatpush2.msra.mxu0 0.0
    %509 = vmatprep.subr.mxu0 0.0
    %510 = vmatpush2.msra.mxu0 0.0
    %511 = vmatprep.subr.mxu0 0.0
    %512 = vmatpush2.msra.mxu0 0.0
    %513 = vmatprep.subr.mxu0 0.0
    %514 = vmatpush2.msra.mxu0 0.0
    %515 = vmatprep.subr.mxu0 0.0
    %516 = vmatpush2.msra.mxu0 0.0
    %517 = vmatprep.subr.mxu0 0.0
    %518 = vmatpush2.msra.mxu0 0.0
    %519 = vmatprep.subr.mxu0 0.0
    %520 = vmatpush2.msra.mxu0 0.0
    %521 = vmatprep.subr.mxu0 0.0
    %522 = vmatpush2.msra.mxu0 0.0
    %523 = vmatprep.subr.mxu0 0.0
    %524 = vmatpush2.msra.mxu0 0.0
    %525 = vmatprep.subr.mxu0 0.0
    %526 = vmatpush2.msra.mxu0 0.0
    %527 = vmatprep.subr.mxu0 0.0
    %528 = vmatpush2.msra.mxu0 0.0
    %529 = vmatprep.subr.mxu0 0.0
    %530 = vmatpush2.msra.mxu0 0.0
    %531 = vmatprep.subr.mxu0 0.0
    %532 = vmatpush2.msra.mxu0 0.0
    %533 = vmatprep.subr.mxu0 0.0
    %534 = vmatpush2.msra.mxu0 0.0
    %535 = vmatprep.mubr.f32.mxu0 0.0
    %536 = vmatmul.mubr.f32.gmra.mxu0 %v466
    %v537 = vpop.f32.mrf.mxu0
    %v538 = vadd.f32 %v463, %v537
    %v539 = vpop.f32.mrf.mxu0
    %540 = vdwg.mxu0
    %v541 = vmul.f32 %v538, 1.442695
    %v542 = vpow.pop %v541
    %543 = vst [vmem:[#allocation2] sm:$0x7] %v542
    // Predicated region
    $region26: #{tpu_custom_call.1} parent=1 // pred_check
      _
    $region27: #{tpu_custom_call.1} parent=1 // pred_check_branch
      %545 = sbr.rel (0) target = $region29
    $region28: #{tpu_custom_call.1} parent=1 // pred_region
      %s547 = ssub.s32 64, 64
      %548 = vsyncadd [#allocation3], %s547
      %s550 = sshll.u32 [#allocation2], 4
      %s551 = int_to_ptr.vmem [resolvable:$true] %s550
      %553 = dma.vmem_to_hbm [thread:$0]  %s551, 64, %s6, [#allocation3]
    $region29: #{tpu_custom_call.1} parent=1 // pred_fallthru
      _
    // Predicated region
    $region30: #{tpu_custom_call.1} parent=1 // pred_check
      _
    $region31: #{tpu_custom_call.1} parent=1 // pred_check_branch
      %555 = sbr.rel (0) target = $region33
    $region32: #{tpu_custom_call.1} parent=1 // pred_region
      %556 = dma.done [#allocation3], 64
    $region33: #{tpu_custom_call.1} parent=1 // pred_fallthru
      _
    %557 = vsyncpa [#allocation3], 1

</llo_original>
